<compile_context>
chip_gen: v6e
topology: v6e:2x2x1
jax: 0.10.0
libtpu: 0.0.40
codegen_flags: <defaults>
</compile_context>

<pallas_src>
import jax
import jax.numpy as jnp
from jax.experimental import pallas as pl
from jax.experimental.pallas import tpu as pltpu


def _interp_kernel(x_ref, r_ref, o_ref):
    # x_ref : (B_TILE, h_tile*W)                 native-dtype input rows, one H block
    # r_ref : (h_tile*W, h_tile*W*scale^2)       0/1 replication block (compute dtype)
    # o_ref : (B_TILE, h_tile*W*scale^2)         native-dtype output rows (lane-dense)
    x = x_ref[...].astype(r_ref.dtype)           # in-kernel cast: free, hidden under DMA
    o_ref[...] = jnp.dot(
        x, r_ref[...], preferred_element_type=jnp.float32
    ).astype(o_ref.dtype)


def _kron_replication_block(h_tile: int, W: int, scale: int, dtype) -> jnp.ndarray:
    """R[(h*W+w), (ho*Wout+wo)] = 1 iff h == ho//scale and w == wo//scale,
    for one block of h_tile input rows (R is block-diagonal over H, every
    block is identical)."""
    Wout = W * scale
    p = jnp.arange(h_tile * W)
    q = jnp.arange(h_tile * scale * Wout)
    h_in, w_in = p // W, p % W                                # (h_tile*W,)
    h_src, w_src = (q // Wout) // scale, (q % Wout) // scale  # (h_tile*W*scale^2,)
    r = (h_in[:, None] == h_src[None, :]) & (w_in[:, None] == w_src[None, :])
    return r.astype(dtype)


def _pick_h_tile(H: int, W: int) -> int:
    """Smallest divisor h of H with (h*W) % 128 == 0 (lane/MXU aligned K);
    fall back to the full H (block == full dim is always a legal BlockSpec)."""
    for h in range(1, H):
        if H % h == 0 and (h * W) % 128 == 0:
            return h
    return H


def interp(x: jnp.ndarray, scale: int = 2) -> jnp.ndarray:
    """Nearest-neighbor upsample of an NCHW tensor by integer `scale` (Pallas TPU)."""
    N, C, H, W = x.shape
    Hout, Wout = H * scale, W * scale
    B = N * C
    HW, HWout = H * W, Hout * Wout

    # bf16/f32 compute in the native dtype (0/1 coefficients -> exact copy).
    # Other dtypes are cast to f32 inside the kernel and stored back natively.
    # TODO(synk): int32/int64/float64 ride the f32 MXU -> exact only for |x| < 2^24.
    if x.dtype in (jnp.bfloat16, jnp.float32):
        compute_dtype = x.dtype
    else:
        compute_dtype = jnp.float32

    # Block-diagonal tiling of R over H.
    h_tile = _pick_h_tile(H, W)
    in_cols = h_tile * W                       # K  (128 for H=W=16, h_tile=8)
    out_cols = in_cols * scale * scale         # N  (512 for scale=2)
    n_hblk = H // h_tile

    x2 = x.reshape(B, HW)                                      # free metadata reshape
    r = _kron_replication_block(h_tile, W, scale, compute_dtype)

    # Large B tile (multiple of 8 sublanes) to amortize per-step pipeline overhead.
    in_item = jnp.dtype(x.dtype).itemsize
    cmp_item = jnp.dtype(compute_dtype).itemsize
    cap = 2048 if cmp_item <= 2 else 1024
    b_tile = B if B <= cap else cap            # cap is already a multiple of 8
    grid = (pl.cdiv(B, b_tile), n_hblk)        # >=2 steps -> both v7x TCs busy

    # Double-buffered in/out + single-buffered R, with 2x slack; explicit limit
    # (v5e default scoped VMEM is only 16 MiB).
    io_item = max(in_item, cmp_item)
    vmem_est = (2 * b_tile * in_cols * io_item
                + 2 * b_tile * out_cols * io_item
                + in_cols * out_cols * cmp_item)
    vmem_limit = int(min(100 * 2**20, max(32 * 2**20, 2 * vmem_est)))

    cost = pl.CostEstimate(
        flops=2 * B * HWout * in_cols,         # real MXU work (matters on v5e / f32)
        transcendentals=0,
        bytes_accessed=(B * HW + B * HWout) * in_item
        + in_cols * out_cols * cmp_item,
    )

    out2 = pl.pallas_call(
        _interp_kernel,
        out_shape=jax.ShapeDtypeStruct((B, HWout), x.dtype),
        grid_spec=pltpu.PrefetchScalarGridSpec(
            num_scalar_prefetch=0,
            grid=grid,
            in_specs=[
                pl.BlockSpec((b_tile, in_cols), lambda b, j: (b, j)),
                pl.BlockSpec((in_cols, out_cols), lambda b, j: (0, 0),
                             pipeline_mode=pl.Buffered(1)),   # constant -> DMA'd once
            ],
            out_specs=pl.BlockSpec((b_tile, out_cols), lambda b, j: (b, j)),
        ),
        compiler_params=pltpu.CompilerParams(
            dimension_semantics=("parallel", "parallel"),
            vmem_limit_bytes=vmem_limit,
        ),
        cost_estimate=cost,
    )(x2, r)

    # Free (row-major contiguous) reshape back to NCHW; dtype already native.
    return out2.reshape(N, C, Hout, Wout)


if __name__ == "__main__":
    key = jax.random.PRNGKey(0)
    N, C, H, W = 2, 4, 16, 16
    scale = 2
    x = jax.random.normal(key, (N, C, H, W), dtype=jnp.float32)

    out = jax.block_until_ready(interp(x, scale=scale))

    # Reference: nearest-neighbor upsample == repeat each pixel `scale` times.
    ref = jnp.repeat(jnp.repeat(x, scale, axis=2), scale, axis=3)
    assert out.shape == (N, C, H * scale, W * scale), out.shape
    assert out.dtype == x.dtype, out.dtype
    assert jnp.allclose(out, ref, atol=1e-6), "mismatch vs nearest-neighbor reference"

    print("KERNEL_OK")
</pallas_src>

<mosaic_0001>
module attributes {stable_mosaic.version = 11 : i64} {
  func.func @_interp_kernel(%arg0: i32, %arg1: i32, %arg2: memref<8x128xf32, #tpu.memory_space<vmem>>, %arg3: memref<128x512xf32, #tpu.memory_space<vmem>>, %arg4: memref<8x512xf32, #tpu.memory_space<vmem>>) attributes {dimension_semantics = [#tpu.dimension_semantics<parallel>, #tpu.dimension_semantics<parallel>], iteration_bounds = array<i64: 1, 2>, scalar_prefetch = 0 : i64, scratch_operands = 0 : i64, tpu.core_type = #tpu.core_type<tc>, window_params = [{transform_indices = @transform_0, window_bounds = array<i64: 8, 128>}, {pipeline_mode = #tpu.pipeline_mode<synchronous>, transform_indices = @transform_1, window_bounds = array<i64: 128, 512>}, {transform_indices = @transform_2, window_bounds = array<i64: 8, 512>}]} {
    %c0 = arith.constant 0 : index
    %c0_0 = arith.constant 0 : index
    %0 = vector.load %arg2[%c0, %c0_0] : memref<8x128xf32, #tpu.memory_space<vmem>>, vector<8x128xf32>
    %c0_1 = arith.constant 0 : index
    %c0_2 = arith.constant 0 : index
    %1 = vector.load %arg3[%c0_1, %c0_2] : memref<128x512xf32, #tpu.memory_space<vmem>>, vector<128x512xf32>
    %cst = arith.constant dense<0.000000e+00> : vector<8x512xf32>
    %2 = tpu.matmul %0, %1, %cst {dimension_numbers = #tpu.dot_dimension_numbers<[1], [0], [0], [1], [0, 0, 1, 1], [], []>} : vector<8x128xf32>, vector<128x512xf32>, vector<8x512xf32> -> vector<8x512xf32>
    %c0_3 = arith.constant 0 : index
    %c0_4 = arith.constant 0 : index
    %3 = vector.load %arg4[%c0_3, %c0_4] : memref<8x512xf32, #tpu.memory_space<vmem>>, vector<8x512xf32>
    tpu.vector_store %arg4[%c0_3, %c0_4], %2 {strides = array<i32>} : memref<8x512xf32, #tpu.memory_space<vmem>>, vector<8x512xf32>,
    return
  }
  func.func @transform_0(%arg0: i32, %arg1: i32) -> (i32, i32) {
    %c0_i32 = arith.constant 0 : i32
    return %arg0, %arg1 : i32, i32
  }
  func.func @transform_1(%arg0: i32, %arg1: i32) -> (i32, i32) {
    %c0_i32 = arith.constant 0 : i32
    %c0_i32_0 = arith.constant 0 : i32
    %c0_i32_1 = arith.constant 0 : i32
    return %c0_i32, %c0_i32_0 : i32, i32
  }
  func.func @transform_2(%arg0: i32, %arg1: i32) -> (i32, i32) {
    %c0_i32 = arith.constant 0 : i32
    return %arg0, %arg1 : i32, i32
  }
}

</mosaic_0001>

<llo_original>
// kernel: tpu_custom_call.1
$region0: #{tpu_custom_call.1}
  #allocation0 [shape = 'u32[]', space=smem, size = 0x4, offset = 0x4, fixed_abs, tag = 'smem constant byte address 0x4 - core index']
  #allocation1 [shape = 'u32[144,128]{1,0:T(1,128)}', space=vmem, size = 0x12000, scoped, tag = 'internal scratch']
  %s0 = inlined_call_operand.hbm [shape: f32[8,256], index: 0, kind: input, shape index: {}]
  %s1 = inlined_call_operand.hbm [shape: f32[128,512], index: 1, kind: input, shape index: {}]
  %s2 = inlined_call_operand.hbm [shape: f32[8,1024], index: 2, kind: output, shape index: {}]
  %s3 = sld [smem:[#allocation0]]
  $region49: #{tpu_custom_call.1} parent=0
    _
  %s5 = ssub.s32 1, %s3
  %s6 = scalar_select 0, %s5, %s3
  $region1: #{tpu_custom_call.1} parent=0
    #allocation2 [shape = 'u8[8192]{0}', space=vmem, size = 0x2000, scoped, tag = 'input window, operand 0']
    #allocation3 [shape = 's32[2]{0}', space=sflag, size = 0x8, scoped, tag = 'scoped memory for tpu_custom_call.1']
    #allocation4 [shape = 's32[2]{0}', space=sflag, size = 0x8, scoped, tag = 'scoped memory for tpu_custom_call.1']
    #allocation5 [shape = 'u8[262144]{0}', space=vmem, size = 0x40000, scoped, tag = 'input window, operand 1, single buffered']
    #allocation6 [shape = 's32[1]{0}', space=sflag, size = 0x4, scoped, tag = 'scoped memory for tpu_custom_call.1']
    #allocation7 [shape = 'u8[32768]{0}', space=vmem, size = 0x8000, scoped, tag = 'output window, operand 0']
    %7 = vsyncpa [#allocation3], 0
    %s8 = scalar_lea.sflag [#allocation3], 1
    %9 = vsyncpa %s8, 0
    %10 = vsyncpa [#allocation6], 0
    %11 = vsyncpa [#allocation4], 0
    %s12 = scalar_lea.sflag [#allocation4], 1
    %13 = vsyncpa %s12, 0
    loop: start=0, step=1, limit=4
    $region2: #{tpu_custom_call.1} parent=1 // loop_pre_header
      _
    $region3: #{tpu_custom_call.1} parent=1 // loop_header
      %s15 = sphi 0, %s19
      %p16 = scmp.ge.s32.totalorder %s15, 4
      %s22 = sphi 0, %s34
      %s23 = sphi 0, %s30
      %s24 = sphi 0, %s22
      %s25 = sphi 0, %s23
      %s26 = sphi 0, %s24
      %s27 = sphi 0, %s25
      %s39 = sphi 0, %s41
      %s42 = sphi 0, %s39
      %s43 = sphi 0, %s42
      %s59 = sphi 0, %s43
      %s63 = sphi 0, %s63
      %s65 = sphi 0, %s63
      %s66 = sphi 0, %s65
      %s80 = sphi 0, %s66
      %s88 = sphi 0, %s90
      %s91 = sphi 0, %s88
      %s92 = sphi 0, %s91
      %s108 = sphi 0, %s92
    $region4: #{tpu_custom_call.1} parent=1 // loop_header_branch
      %18 = sbr.rel (%p16) target = $region8
    $region5: #{tpu_custom_call.1} parent=1 // loop_body
      %s20 = ssub.s32 %s15, 1
      %s21 = ssub.s32 %s15, 2
      %s28 = sadd.s32 1, %s23
      %p29 = scmp.ge.s32.totalorder %s28, 2
      %s30 = scalar_select %p29, 0, %s28
      %s31 = sadd.s32 1, %s22
      %s32 = scalar_select %p29, %s31, %s22
      %p33 = scmp.ge.s32.totalorder %s32, 1
      %s34 = scalar_select %p33, 0, %s32
      %s35 = ssub.s32 %s22, %s34
      %s36 = ssub.s32 %s23, %s30
      %s37 = sor.u32 %s35, %s36
      %p38 = scmp.eq.s32.totalorder %s37, 0
      %s40 = sadd.s32 %s39, 1
      %s41 = scalar_select %p38, %s39, %s40
      %p44 = pneg %p38
      %p45 = scmp.eq.s32.totalorder %s15, 1
      %p46 = por %p44, %p45
      %p47 = scmp.ne.s32.totalorder %s39, %s42
      %p48 = scmp.eq.s32.totalorder %s15, 0
      %p49 = por %p47, %p48
      %p50 = scmp.ne.s32.totalorder %s39, %s42
      %p51 = scmp.eq.s32.totalorder %s20, 1
      %p52 = por %p50, %p51
      %p53 = scmp.ne.s32.totalorder %s42, %s43
      %p54 = scmp.eq.s32.totalorder %s20, 0
      %p55 = por %p53, %p54
      %p56 = scmp.ne.s32.totalorder %s42, %s43
      %p57 = scmp.eq.s32.totalorder %s21, 1
      %p58 = por %p56, %p57
      %p60 = scmp.ne.s32.totalorder %s43, %s59
      %p61 = scmp.eq.s32.totalorder %s21, 0
      %p62 = por %p60, %p61
      %s64 = sadd.s32 %s63, 1
      %p67 = scmp.eq.s32.totalorder %s15, 1
      %p68 = scmp.ne.s32.totalorder %s63, %s65
      %p69 = scmp.eq.s32.totalorder %s15, 0
      %p70 = por %p68, %p69
      %p71 = scmp.ne.s32.totalorder %s63, %s65
      %p72 = scmp.eq.s32.totalorder %s20, 1
      %p73 = por %p71, %p72
      %p74 = scmp.ne.s32.totalorder %s65, %s66
      %p75 = scmp.eq.s32.totalorder %s20, 0
      %p76 = por %p74, %p75
      %p77 = scmp.ne.s32.totalorder %s65, %s66
      %p78 = scmp.eq.s32.totalorder %s21, 1
      %p79 = por %p77, %p78
      %p81 = scmp.ne.s32.totalorder %s66, %s80
      %p82 = scmp.eq.s32.totalorder %s21, 0
      %p83 = por %p81, %p82
      %s84 = ssub.s32 %s22, %s34
      %s85 = ssub.s32 %s23, %s30
      %s86 = sor.u32 %s84, %s85
      %p87 = scmp.eq.s32.totalorder %s86, 0
      %s89 = sadd.s32 %s88, 1
      %s90 = scalar_select %p87, %s88, %s89
      %p93 = pneg %p87
      %p94 = scmp.eq.s32.totalorder %s15, 1
      %p95 = por %p93, %p94
      %p96 = scmp.ne.s32.totalorder %s88, %s91
      %p97 = scmp.eq.s32.totalorder %s15, 0
      %p98 = por %p96, %p97
      %p99 = scmp.ne.s32.totalorder %s88, %s91
      %p100 = scmp.eq.s32.totalorder %s20, 1
      %p101 = por %p99, %p100
      %p102 = scmp.ne.s32.totalorder %s91, %s92
      %p103 = scmp.eq.s32.totalorder %s20, 0
      %p104 = por %p102, %p103
      %p105 = scmp.ne.s32.totalorder %s91, %s92
      %p106 = scmp.eq.s32.totalorder %s21, 1
      %p107 = por %p105, %p106
      %p109 = scmp.ne.s32.totalorder %s92, %s108
      %p110 = scmp.eq.s32.totalorder %s21, 0
      %p111 = por %p109, %p110
      %p112 = scmp.le.s32.totalorder 1, %s15
      %p113 = scmp.lt.s32.totalorder %s15, 3
      %p114 = pnand %p112, %p113
      %p115 = pneg %p114
      // Predicated region
      $region9: #{tpu_custom_call.1} parent=5 // pred_check
        _
      $region10: #{tpu_custom_call.1} parent=5 // pred_check_branch
        %117 = sbr.rel (%p114) target = $region12
      $region11: #{tpu_custom_call.1} parent=5 // pred_region
        %s118 = ssub.s32 %s15, 1
        // Predicated region
        $region13: #{tpu_custom_call.1} parent=11 // pred_check
          %p119 = pneg %p76
        $region14: #{tpu_custom_call.1} parent=11 // pred_check_branch
          %121 = sbr.rel (%p119) target = $region16
        $region15: #{tpu_custom_call.1} parent=11 // pred_region
          %s123 = ssub.s32 8192, 8192
          %124 = vsyncadd [#allocation6], %s123
          %s125 = sshll.u32 [#allocation5], 4
          %s126 = int_to_ptr.vmem [resolvable:$true] %s125
          %131 = dma.hbm_to_vmem [thread:$0]  %s1, 8192, %s126, [#allocation6], 512, 512, 32
        $region16: #{tpu_custom_call.1} parent=11 // pred_fallthru
          _
      $region12: #{tpu_custom_call.1} parent=5 // pred_fallthru
        _
      %p132 = scmp.lt.s32.totalorder %s15, 2
      // Predicated region
      $region17: #{tpu_custom_call.1} parent=5 // pred_check
        %p133 = pneg %p132
      $region18: #{tpu_custom_call.1} parent=5 // pred_check_branch
        %135 = sbr.rel (%p133) target = $region20
      $region19: #{tpu_custom_call.1} parent=5 // pred_region
        // Predicated region
        $region21: #{tpu_custom_call.1} parent=19 // pred_check
          %p136 = pneg %p49
        $region22: #{tpu_custom_call.1} parent=19 // pred_check_branch
          %138 = sbr.rel (%p136) target = $region24
        $region23: #{tpu_custom_call.1} parent=19 // pred_region
          %s139 = sand.u32 %s39, 1
          %s140 = scalar_lea.sflag [#allocation3], %s139
          %s141 = sand.u32 %s39, 1
          %s142 = smul.addr %s141, 8
          %s143 = scalar_lea.vmem [#allocation2], %s142
          %s145 = ssub.s32 128, 128
          %146 = vsyncadd %s140, %s145
          %s147 = smul.addr %s22, 2
          %s148 = sadd.s32 %s23, %s147
          %s149 = smul.addr %s148, 128
          %s150 = scalar_lea.hbm %s0, %s149
          %s152 = sshll.u32 %s143, 4
          %s153 = int_to_ptr.vmem [resolvable:$true] %s152
          %155 = dma.hbm_to_vmem [thread:$0]  %s150, 128, %s153, %s140
        $region24: #{tpu_custom_call.1} parent=19 // pred_fallthru
          _
      $region20: #{tpu_custom_call.1} parent=5 // pred_fallthru
        _
      %p156 = scmp.le.s32.totalorder 1, %s15
      %p157 = scmp.lt.s32.totalorder %s15, 3
      %p158 = pnand %p156, %p157
      %p159 = pneg %p158
      // Predicated region
      $region25: #{tpu_custom_call.1} parent=5 // pred_check
        _
      $region26: #{tpu_custom_call.1} parent=5 // pred_check_branch
        %161 = sbr.rel (%p158) target = $region28
      $region27: #{tpu_custom_call.1} parent=5 // pred_region
        %s162 = ssub.s32 %s15, 1
        %s163 = sand.u32 %s42, 1
        %s164 = scalar_lea.sflag [#allocation3], %s163
        %s165 = sand.u32 %s42, 1
        %s166 = smul.addr %s165, 8
        %s167 = scalar_lea.vmem [#allocation2], %s166
        // Predicated region
        $region29: #{tpu_custom_call.1} parent=27 // pred_check
          %p168 = pneg %p55
        $region30: #{tpu_custom_call.1} parent=27 // pred_check_branch
          %170 = sbr.rel (%p168) target = $region32
        $region31: #{tpu_custom_call.1} parent=27 // pred_region
          %171 = dma.done %s164, 128
        $region32: #{tpu_custom_call.1} parent=27 // pred_fallthru
          _
        // Predicated region
        $region33: #{tpu_custom_call.1} parent=27 // pred_check
          %p172 = pneg %p76
        $region34: #{tpu_custom_call.1} parent=27 // pred_check_branch
          %174 = sbr.rel (%p172) target = $region36
        $region35: #{tpu_custom_call.1} parent=27 // pred_region
          %175 = dma.done [#allocation6], 8192
        $region36: #{tpu_custom_call.1} parent=27 // pred_fallthru
          _
        %s176 = sand.u32 %s42, 1
        %s177 = scalar_lea.sflag [#allocation3], %s176
        %s178 = sand.u32 %s42, 1
        %s179 = smul.addr %s178, 8
        %s180 = scalar_lea.vmem [#allocation2], %s179
        %p181 = pneg %p55
        %p182 = pneg %p52
        %p183 = pneg %p76
        %p184 = pneg %p73
        %p185 = pneg %p104
        %p186 = pneg %p101
        %s187 = sand.u32 %s91, 1
        %s188 = scalar_lea.sflag [#allocation4], %s187
        %s189 = sand.u32 %s91, 1
        %s190 = smul.addr %s189, 32
        %s191 = scalar_lea.vmem [#allocation7], %s190
        %s192 = smul.u32 4, %s25
        %v193 = vld [vmem:[%s167] sm:$0xff]
        %v194 = vld [vmem:[#allocation5] sm:$0xff]
        %v195 = vld [vmem:[#allocation5 + $0x8] sm:$0xff]
        %v196 = vld [vmem:[#allocation5 + $0x10] sm:$0xff]
        %v197 = vld [vmem:[#allocation5 + $0x18] sm:$0xff]
        %v198 = vld [vmem:[#allocation5 + $0x20] sm:$0xff]
        %v199 = vld [vmem:[#allocation5 + $0x28] sm:$0xff]
        %v200 = vld [vmem:[#allocation5 + $0x30] sm:$0xff]
        %v201 = vld [vmem:[#allocation5 + $0x38] sm:$0xff]
        %v202 = vld [vmem:[#allocation5 + $0x40] sm:$0xff]
        %v203 = vld [vmem:[#allocation5 + $0x48] sm:$0xff]
        %v204 = vld [vmem:[#allocation5 + $0x50] sm:$0xff]
        %v205 = vld [vmem:[#allocation5 + $0x58] sm:$0xff]
        %v206 = vld [vmem:[#allocation5 + $0x60] sm:$0xff]
        %v207 = vld [vmem:[#allocation5 + $0x68] sm:$0xff]
        %v208 = vld [vmem:[#allocation5 + $0x70] sm:$0xff]
        %v209 = vld [vmem:[#allocation5 + $0x78] sm:$0xff]
        %v210 = vld [vmem:[#allocation5 + $0x80] sm:$0xff]
        %v211 = vld [vmem:[#allocation5 + $0x88] sm:$0xff]
        %v212 = vld [vmem:[#allocation5 + $0x90] sm:$0xff]
        %v213 = vld [vmem:[#allocation5 + $0x98] sm:$0xff]
        %v214 = vld [vmem:[#allocation5 + $0xa0] sm:$0xff]
        %v215 = vld [vmem:[#allocation5 + $0xa8] sm:$0xff]
        %v216 = vld [vmem:[#allocation5 + $0xb0] sm:$0xff]
        %v217 = vld [vmem:[#allocation5 + $0xb8] sm:$0xff]
        %v218 = vld [vmem:[#allocation5 + $0xc0] sm:$0xff]
        %v219 = vld [vmem:[#allocation5 + $0xc8] sm:$0xff]
        %v220 = vld [vmem:[#allocation5 + $0xd0] sm:$0xff]
        %v221 = vld [vmem:[#allocation5 + $0xd8] sm:$0xff]
        %v222 = vld [vmem:[#allocation5 + $0xe0] sm:$0xff]
        %v223 = vld [vmem:[#allocation5 + $0xe8] sm:$0xff]
        %v224 = vld [vmem:[#allocation5 + $0xf0] sm:$0xff]
        %v225 = vld [vmem:[#allocation5 + $0xf8] sm:$0xff]
        %v226 = vld [vmem:[#allocation5 + $0x100] sm:$0xff]
        %v227 = vld [vmem:[#allocation5 + $0x108] sm:$0xff]
        %v228 = vld [vmem:[#allocation5 + $0x110] sm:$0xff]
        %v229 = vld [vmem:[#allocation5 + $0x118] sm:$0xff]
        %v230 = vld [vmem:[#allocation5 + $0x120] sm:$0xff]
        %v231 = vld [vmem:[#allocation5 + $0x128] sm:$0xff]
        %v232 = vld [vmem:[#allocation5 + $0x130] sm:$0xff]
        %v233 = vld [vmem:[#allocation5 + $0x138] sm:$0xff]
        %v234 = vld [vmem:[#allocation5 + $0x140] sm:$0xff]
        %v235 = vld [vmem:[#allocation5 + $0x148] sm:$0xff]
        %v236 = vld [vmem:[#allocation5 + $0x150] sm:$0xff]
        %v237 = vld [vmem:[#allocation5 + $0x158] sm:$0xff]
        %v238 = vld [vmem:[#allocation5 + $0x160] sm:$0xff]
        %v239 = vld [vmem:[#allocation5 + $0x168] sm:$0xff]
        %v240 = vld [vmem:[#allocation5 + $0x170] sm:$0xff]
        %v241 = vld [vmem:[#allocation5 + $0x178] sm:$0xff]
        %v242 = vld [vmem:[#allocation5 + $0x180] sm:$0xff]
        %v243 = vld [vmem:[#allocation5 + $0x188] sm:$0xff]
        %v244 = vld [vmem:[#allocation5 + $0x190] sm:$0xff]
        %v245 = vld [vmem:[#allocation5 + $0x198] sm:$0xff]
        %v246 = vld [vmem:[#allocation5 + $0x1a0] sm:$0xff]
        %v247 = vld [vmem:[#allocation5 + $0x1a8] sm:$0xff]
        %v248 = vld [vmem:[#allocation5 + $0x1b0] sm:$0xff]
        %v249 = vld [vmem:[#allocation5 + $0x1b8] sm:$0xff]
        %v250 = vld [vmem:[#allocation5 + $0x1c0] sm:$0xff]
        %v251 = vld [vmem:[#allocation5 + $0x1c8] sm:$0xff]
        %v252 = vld [vmem:[#allocation5 + $0x1d0] sm:$0xff]
        %v253 = vld [vmem:[#allocation5 + $0x1d8] sm:$0xff]
        %v254 = vld [vmem:[#allocation5 + $0x1e0] sm:$0xff]
        %v255 = vld [vmem:[#allocation5 + $0x1e8] sm:$0xff]
        %v256 = vld [vmem:[#allocation5 + $0x1f0] sm:$0xff]
        %v257 = vld [vmem:[#allocation5 + $0x1f8] sm:$0xff]
        %258 = vmatprep.subr.mxu0 %v255
        %259 = vmatpush1.msra.mxu0 %v254
        %260 = vmatprep.subr.mxu0 %v251
        %261 = vmatpush1.msra.mxu0 %v250
        %262 = vmatprep.subr.mxu0 %v247
        %263 = vmatpush1.msra.mxu0 %v246
        %264 = vmatprep.subr.mxu0 %v243
        %265 = vmatpush1.msra.mxu0 %v242
        %266 = vmatprep.subr.mxu0 %v239
        %267 = vmatpush1.msra.mxu0 %v238
        %268 = vmatprep.subr.mxu0 %v235
        %269 = vmatpush1.msra.mxu0 %v234
        %270 = vmatprep.subr.mxu0 %v231
        %271 = vmatpush1.msra.mxu0 %v230
        %272 = vmatprep.subr.mxu0 %v227
        %273 = vmatpush1.msra.mxu0 %v226
        %274 = vmatprep.subr.mxu0 %v223
        %275 = vmatpush1.msra.mxu0 %v222
        %276 = vmatprep.subr.mxu0 %v219
        %277 = vmatpush1.msra.mxu0 %v218
        %278 = vmatprep.subr.mxu0 %v215
        %279 = vmatpush1.msra.mxu0 %v214
        %280 = vmatprep.subr.mxu0 %v211
        %281 = vmatpush1.msra.mxu0 %v210
        %282 = vmatprep.subr.mxu0 %v207
        %283 = vmatpush1.msra.mxu0 %v206
        %284 = vmatprep.subr.mxu0 %v203
        %285 = vmatpush1.msra.mxu0 %v202
        %286 = vmatprep.subr.mxu0 %v199
        %287 = vmatpush1.msra.mxu0 %v198
        %288 = vmatprep.subr.mxu0 %v195
        %289 = vmatpush1.msra.mxu0 %v194
        %290 = vmatprep.subr.mxu0 0.0
        %291 = vmatpush2.msra.mxu0 0.0
        %292 = vmatprep.subr.mxu0 0.0
        %293 = vmatpush2.msra.mxu0 0.0
        %294 = vmatprep.subr.mxu0 0.0
        %295 = vmatpush2.msra.mxu0 0.0
        %296 = vmatprep.subr.mxu0 0.0
        %297 = vmatpush2.msra.mxu0 0.0
        %298 = vmatprep.subr.mxu0 0.0
        %299 = vmatpush2.msra.mxu0 0.0
        %300 = vmatprep.subr.mxu0 0.0
        %301 = vmatpush2.msra.mxu0 0.0
        %302 = vmatprep.subr.mxu0 0.0
        %303 = vmatpush2.msra.mxu0 0.0
        %304 = vmatprep.subr.mxu0 0.0
        %305 = vmatpush2.msra.mxu0 0.0
        %306 = vmatprep.subr.mxu0 0.0
        %307 = vmatpush2.msra.mxu0 0.0
        %308 = vmatprep.subr.mxu0 0.0
        %309 = vmatpush2.msra.mxu0 0.0
        %310 = vmatprep.subr.mxu0 0.0
        %311 = vmatpush2.msra.mxu0 0.0
        %312 = vmatprep.subr.mxu0 0.0
        %313 = vmatpush2.msra.mxu0 0.0
        %314 = vmatprep.subr.mxu0 0.0
        %315 = vmatpush2.msra.mxu0 0.0
        %316 = vmatprep.subr.mxu0 0.0
        %317 = vmatpush2.msra.mxu0 0.0
        %318 = vmatprep.subr.mxu0 0.0
        %319 = vmatpush2.msra.mxu0 0.0
        %320 = vmatprep.subr.mxu0 0.0
        %321 = vmatpush2.msra.mxu0 0.0
        %322 = vmatprep.mubr.f32.mxu0 0.0
        %323 = vmatmul.mubr.f32.gmra.mxu0 %v193
        %v324 = vpop.f32.mrf.mxu0
        %v325 = vadd.f32 0.0, %v324
        %v326 = vpop.f32.mrf.mxu0
        %v327 = vadd.f32 0.0, %v326
        %328 = vdwg.mxu0
        %329 = vmatprep.subr.mxu0 %v257
        %330 = vmatpush1.msra.mxu0 %v256
        %331 = vmatprep.subr.mxu0 %v253
        %332 = vmatpush1.msra.mxu0 %v252
        %333 = vmatprep.subr.mxu0 %v249
        %334 = vmatpush1.msra.mxu0 %v248
        %335 = vmatprep.subr.mxu0 %v245
        %336 = vmatpush1.msra.mxu0 %v244
        %337 = vmatprep.subr.mxu0 %v241
        %338 = vmatpush1.msra.mxu0 %v240
        %339 = vmatprep.subr.mxu0 %v237
        %340 = vmatpush1.msra.mxu0 %v236
        %341 = vmatprep.subr.mxu0 %v233
        %342 = vmatpush1.msra.mxu0 %v232
        %343 = vmatprep.subr.mxu0 %v229
        %344 = vmatpush1.msra.mxu0 %v228
        %345 = vmatprep.subr.mxu0 %v225
        %346 = vmatpush1.msra.mxu0 %v224
        %347 = vmatprep.subr.mxu0 %v221
        %348 = vmatpush1.msra.mxu0 %v220
        %349 = vmatprep.subr.mxu0 %v217
        %350 = vmatpush1.msra.mxu0 %v216
        %351 = vmatprep.subr.mxu0 %v213
        %352 = vmatpush1.msra.mxu0 %v212
        %353 = vmatprep.subr.mxu0 %v209
        %354 = vmatpush1.msra.mxu0 %v208
        %355 = vmatprep.subr.mxu0 %v205
        %356 = vmatpush1.msra.mxu0 %v204
        %357 = vmatprep.subr.mxu0 %v201
        %358 = vmatpush1.msra.mxu0 %v200
        %359 = vmatprep.subr.mxu0 %v197
        %360 = vmatpush1.msra.mxu0 %v196
        %361 = vmatprep.subr.mxu0 0.0
        %362 = vmatpush2.msra.mxu0 0.0
        %363 = vmatprep.subr.mxu0 0.0
        %364 = vmatpush2.msra.mxu0 0.0
        %365 = vmatprep.subr.mxu0 0.0
        %366 = vmatpush2.msra.mxu0 0.0
        %367 = vmatprep.subr.mxu0 0.0
        %368 = vmatpush2.msra.mxu0 0.0
        %369 = vmatprep.subr.mxu0 0.0
        %370 = vmatpush2.msra.mxu0 0.0
        %371 = vmatprep.subr.mxu0 0.0
        %372 = vmatpush2.msra.mxu0 0.0
        %373 = vmatprep.subr.mxu0 0.0
        %374 = vmatpush2.msra.mxu0 0.0
        %375 = vmatprep.subr.mxu0 0.0
        %376 = vmatpush2.msra.mxu0 0.0
        %377 = vmatprep.subr.mxu0 0.0
        %378 = vmatpush2.msra.mxu0 0.0
        %379 = vmatprep.subr.mxu0 0.0
        %380 = vmatpush2.msra.mxu0 0.0
        %381 = vmatprep.subr.mxu0 0.0
        %382 = vmatpush2.msra.mxu0 0.0
        %383 = vmatprep.subr.mxu0 0.0
        %384 = vmatpush2.msra.mxu0 0.0
        %385 = vmatprep.subr.mxu0 0.0
        %386 = vmatpush2.msra.mxu0 0.0
        %387 = vmatprep.subr.mxu0 0.0
        %388 = vmatpush2.msra.mxu0 0.0
        %389 = vmatprep.subr.mxu0 0.0
        %390 = vmatpush2.msra.mxu0 0.0
        %391 = vmatprep.subr.mxu0 0.0
        %392 = vmatpush2.msra.mxu0 0.0
        %393 = vmatprep.mubr.f32.mxu0 0.0
        %394 = vmatmul.mubr.f32.gmra.mxu0 %v193
        %v395 = vpop.f32.mrf.mxu0
        %v396 = vadd.f32 0.0, %v395
        %v397 = vpop.f32.mrf.mxu0
        %v398 = vadd.f32 0.0, %v397
        %399 = vdwg.mxu0
        %400 = vst [vmem:[%s191] sm:$0xff] %v325
        %401 = vst [vmem:[%s191 + $0x8] sm:$0xff] %v327
        %402 = vst [vmem:[%s191 + $0x10] sm:$0xff] %v396
        %403 = vst [vmem:[%s191 + $0x18] sm:$0xff] %v398
        %s404 = sand.u32 %s91, 1
        %s405 = scalar_lea.sflag [#allocation4], %s404
        %s406 = sand.u32 %s91, 1
        %s407 = smul.addr %s406, 32
        %s408 = scalar_lea.vmem [#allocation7], %s407
        // Predicated region
        $region37: #{tpu_custom_call.1} parent=27 // pred_check
          %p409 = pneg %p101
        $region38: #{tpu_custom_call.1} parent=27 // pred_check_branch
          %411 = sbr.rel (%p409) target = $region40
        $region39: #{tpu_custom_call.1} parent=27 // pred_region
          %s412 = smul.u32 4, %s25
          %s414 = ssub.s32 512, 512
          %415 = vsyncadd %s405, %s414
          %s416 = smul.addr %s24, 8
          %s417 = sadd.s32 %s412, %s416
          %s418 = smul.addr %s417, 128
          %s419 = scalar_lea.hbm %s2, %s418
          %s421 = sshll.u32 %s408, 4
          %s422 = int_to_ptr.vmem [resolvable:$true] %s421
          %424 = dma.vmem_to_hbm [thread:$0]  %s422, 512, %s419, %s405
        $region40: #{tpu_custom_call.1} parent=27 // pred_fallthru
          _
      $region28: #{tpu_custom_call.1} parent=5 // pred_fallthru
        _
      %p425 = scmp.le.s32.totalorder 2, %s15
      // Predicated region
      $region41: #{tpu_custom_call.1} parent=5 // pred_check
        %p426 = pneg %p425
      $region42: #{tpu_custom_call.1} parent=5 // pred_check_branch
        %428 = sbr.rel (%p426) target = $region44
      $region43: #{tpu_custom_call.1} parent=5 // pred_region
        %s429 = ssub.s32 %s15, 2
        // Predicated region
        $region45: #{tpu_custom_call.1} parent=43 // pred_check
          %p430 = pneg %p107
        $region46: #{tpu_custom_call.1} parent=43 // pred_check_branch
          %432 = sbr.rel (%p430) target = $region48
        $region47: #{tpu_custom_call.1} parent=43 // pred_region
          %s433 = sand.u32 %s92, 1
          %s434 = scalar_lea.sflag [#allocation4], %s433
          %s435 = sand.u32 %s92, 1
          %s436 = smul.addr %s435, 32
          %s437 = scalar_lea.vmem [#allocation7], %s436
          %438 = dma.done %s434, 512
        $region48: #{tpu_custom_call.1} parent=43 // pred_fallthru
          _
      $region44: #{tpu_custom_call.1} parent=5 // pred_fallthru
        _
    $region6: #{tpu_custom_call.1} parent=1 // loop_footer
      %s19 = sadd.s32 1, %s15
    $region7: #{tpu_custom_call.1} parent=1 // loop_footer_branch
      %14 = sbr.rel target = $region3
    $region8: #{tpu_custom_call.1} parent=1 // loop_exit
      _
    %439 = vsyncpa [#allocation3], 1
    %s440 = scalar_lea.sflag [#allocation3], 1
    %441 = vsyncpa %s440, 1
    %442 = vsyncpa [#allocation6], 1
    %443 = vsyncpa [#allocation4], 1
    %s444 = scalar_lea.sflag [#allocation4], 1
    %445 = vsyncpa %s444, 1

</llo_original>
